<compile_context>
chip_gen: v7x
topology: tpu7x:2x2x1
jax: 0.10.0
libtpu: 0.0.40
codegen_flags: <defaults>
</compile_context>

<pallas_src>
import jax
import jax.numpy as jnp
from jax.experimental import pallas as pl
from jax.experimental.pallas import tpu as pltpu

_ROW_TILE_TARGET = 256        # rows of B*C per block (multiple of 32 -> legal for f32/bf16/int8)
_COL_TILE_TARGET = 2048       # lanes of H*W per block (multiple of 128)
_TINY_BYTES = 1 << 20         # below this total traffic, pure JAX beats kernel launch cost


def _channel_rearrange_kernel(ms_ref, pan_ref, out_ref):
    # ms_ref : (TR, THW)      row/col tile of ms  flattened to (B*C, H*W)
    # pan_ref: (TR, THW)      matching tile of pan
    # out_ref: (TR, 2, THW)   out[:,0,:] <- ms, out[:,1,:] <- pan (both lane-aligned)
    out_ref[:, 0, :] = ms_ref[...]
    out_ref[:, 1, :] = pan_ref[...]


def _pick_tile(extent, target, align):
    """Full extent if it fits inside `target` (always a legal block dim);
    otherwise a fixed aligned tile with a cdiv grid (ragged last block is fine)."""
    if extent <= target:
        return extent
    return (target // align) * align


def channel_rearrange_pallas(ms, pan):
    """ms: (B, C1, H, W); pan: (B, C2, H, W) with C2 >= C1 (the PyTorch loop only
    touches the first C1 pan channels).  Returns (B, 2*C1, H, W) with
    out[:, 2i] = ms[:, i] and out[:, 2i+1] = pan[:, i]."""
    B, C, H, W = ms.shape
    assert pan.shape[0] == B and pan.shape[2] == H and pan.shape[3] == W
    assert pan.shape[1] >= C
    pan = pan[:, :C].astype(ms.dtype)

    HW = H * W
    BC = B * C
    ms2 = ms.reshape(BC, HW)
    pan2 = pan.reshape(BC, HW)

    dtype_bytes = jnp.dtype(ms.dtype).itemsize
    tr = _pick_tile(BC, _ROW_TILE_TARGET, 32)     # 32 covers f32/bf16/int8 sublane tiles
    thw = _pick_tile(HW, _COL_TILE_TARGET, 128)
    grid = (pl.cdiv(BC, tr), pl.cdiv(HW, thw))

    # Per-step VMEM: two input blocks + one (double-width) output block, double-buffered.
    in_block = tr * thw * dtype_bytes
    out_block = tr * 2 * thw * dtype_bytes
    vmem_limit = min(2 * (2 * in_block + out_block) + (4 << 20), 48 << 20)

    total_bytes = 4 * BC * HW * dtype_bytes       # read ms + pan, write both halves

    out_flat = pl.pallas_call(
        _channel_rearrange_kernel,
        out_shape=jax.ShapeDtypeStruct((BC, 2, HW), ms.dtype),
        grid_spec=pltpu.PrefetchScalarGridSpec(
            num_scalar_prefetch=0,
            grid=grid,
            in_specs=[
                pl.BlockSpec((tr, thw), lambda i, j: (i, j)),
                pl.BlockSpec((tr, thw), lambda i, j: (i, j)),
            ],
            out_specs=pl.BlockSpec((tr, 2, thw), lambda i, j: (i, 0, j)),
        ),
        compiler_params=pltpu.CompilerParams(
            dimension_semantics=("parallel", "parallel"),
            vmem_limit_bytes=vmem_limit,
        ),
        cost_estimate=pl.CostEstimate(
            flops=0, transcendentals=0, bytes_accessed=total_bytes),
    )(ms2, pan2)

    # (B*C, 2, H*W) row-major is bit-identical to (B, 2C, H, W) with channels
    # interleaved ms0, pan0, ms1, pan1, ... -> reshape is free.
    return out_flat.reshape(B, 2 * C, H, W)


def channel_rearrange_reference(ms, pan):
    """Pure-JAX reference mirroring the PyTorch module."""
    B, C, H, W = ms.shape
    return jnp.stack([ms, pan[:, :C].astype(ms.dtype)], axis=2).reshape(B, 2 * C, H, W)


def channel_rearrange(ms, pan):
    """Dispatcher: tiny inputs (launch/DMA-setup dominated) go to pure JAX,
    larger inputs go through the Pallas copy kernel."""
    B, C, H, W = ms.shape
    total_bytes = 4 * B * C * H * W * jnp.dtype(ms.dtype).itemsize
    if total_bytes < _TINY_BYTES:
        return channel_rearrange_reference(ms, pan)
    return channel_rearrange_pallas(ms, pan)


if __name__ == "__main__":
    B, C, H, W = 2, 4, 16, 16

    key = jax.random.PRNGKey(0)
    k_ms, k_pan = jax.random.split(key, 2)
    ms = jax.random.normal(k_ms, (B, C, H, W), dtype=jnp.float32)
    pan = jax.random.normal(k_pan, (B, C, H, W), dtype=jnp.float32)

    # Exercise the Pallas kernel directly (the dispatcher would use the pure-JAX
    # path at this tiny size).
    out = channel_rearrange_pallas(ms, pan)
    out = jax.block_until_ready(out)

    ref = channel_rearrange_reference(ms, pan)
    ref = jax.block_until_ready(ref)

    assert out.shape == (B, 2 * C, H, W), out.shape
    assert jnp.array_equal(out, ref), float(jnp.max(jnp.abs(out - ref)))

    print("KERNEL_OK")
</pallas_src>

<mosaic_0001>
module attributes {stable_mosaic.version = 11 : i64} {
  func.func @_channel_rearrange_kernel(%arg0: i32, %arg1: i32, %arg2: memref<8x256xf32, #tpu.memory_space<vmem>>, %arg3: memref<8x256xf32, #tpu.memory_space<vmem>>, %arg4: memref<8x2x256xf32, #tpu.memory_space<vmem>>) attributes {dimension_semantics = [#tpu.dimension_semantics<parallel>, #tpu.dimension_semantics<parallel>], iteration_bounds = array<i64: 1, 1>, scalar_prefetch = 0 : i64, scratch_operands = 0 : i64, tpu.core_type = #tpu.core_type<tc>, window_params = [{transform_indices = @transform_0, window_bounds = array<i64: 8, 256>}, {transform_indices = @transform_1, window_bounds = array<i64: 8, 256>}, {transform_indices = @transform_2, window_bounds = array<i64: 8, 2, 256>}]} {
    %c0 = arith.constant 0 : index
    %c0_0 = arith.constant 0 : index
    %0 = vector.load %arg2[%c0, %c0_0] : memref<8x256xf32, #tpu.memory_space<vmem>>, vector<8x256xf32>
    %c0_1 = arith.constant 0 : index
    %c0_2 = arith.constant 0 : index
    %c0_3 = arith.constant 0 : index
    %1 = vector.load %arg4[%c0_1, %c0_2, %c0_3] : memref<8x2x256xf32, #tpu.memory_space<vmem>>, vector<8x1x256xf32>
    %2 = vector.shape_cast %1 : vector<8x1x256xf32> to vector<8x256xf32>
    %3 = vector.shape_cast %0 : vector<8x256xf32> to vector<8x1x256xf32>
    tpu.vector_store %arg4[%c0_1, %c0_2, %c0_3], %3 {strides = array<i32>} : memref<8x2x256xf32, #tpu.memory_space<vmem>>, vector<8x1x256xf32>,
    %c0_4 = arith.constant 0 : index
    %c0_5 = arith.constant 0 : index
    %4 = vector.load %arg3[%c0_4, %c0_5] : memref<8x256xf32, #tpu.memory_space<vmem>>, vector<8x256xf32>
    %c0_6 = arith.constant 0 : index
    %c1 = arith.constant 1 : index
    %c0_7 = arith.constant 0 : index
    %5 = vector.load %arg4[%c0_6, %c1, %c0_7] : memref<8x2x256xf32, #tpu.memory_space<vmem>>, vector<8x1x256xf32>
    %6 = vector.shape_cast %5 : vector<8x1x256xf32> to vector<8x256xf32>
    %7 = vector.shape_cast %4 : vector<8x256xf32> to vector<8x1x256xf32>
    tpu.vector_store %arg4[%c0_6, %c1, %c0_7], %7 {strides = array<i32>} : memref<8x2x256xf32, #tpu.memory_space<vmem>>, vector<8x1x256xf32>,
    return
  }
  func.func @transform_0(%arg0: i32, %arg1: i32) -> (i32, i32) {
    %c0_i32 = arith.constant 0 : i32
    return %arg0, %arg1 : i32, i32
  }
  func.func @transform_1(%arg0: i32, %arg1: i32) -> (i32, i32) {
    %c0_i32 = arith.constant 0 : i32
    return %arg0, %arg1 : i32, i32
  }
  func.func @transform_2(%arg0: i32, %arg1: i32) -> (i32, i32, i32) {
    %c0_i32 = arith.constant 0 : i32
    %c0_i32_0 = arith.constant 0 : i32
    return %arg0, %c0_i32, %arg1 : i32, i32, i32
  }
}

</mosaic_0001>

<llo_original>
// kernel: tpu_custom_call.1
$region0: #{tpu_custom_call.1}
  #allocation0 [shape = 'u32[]', space=smem, size = 0x4, offset = 0x4, fixed_abs, tag = 'smem constant byte address 0x4 - core index']
  #allocation1 [shape = 'u32[144,128]{1,0:T(1,128)}', space=vmem, size = 0x12000, scoped, tag = 'internal scratch']
  %s0 = inlined_call_operand.hbm [shape: f32[8,256], index: 0, kind: input, shape index: {}]
  %s1 = inlined_call_operand.hbm [shape: f32[8,256], index: 1, kind: input, shape index: {}]
  %s2 = inlined_call_operand.hbm [shape: f32[8,2,256], index: 2, kind: output, shape index: {}]
  %s3 = sld [smem:[#allocation0]]
  $region26: #{tpu_custom_call.1} parent=0
    _
  %s5 = ssub.s32 1, %s3
  %s6 = scalar_select 0, %s5, %s3
  $region1: #{tpu_custom_call.1} parent=0
    #allocation2 [shape = 'u8[8192]{0}', space=vmem, size = 0x2000, scoped, tag = 'input window, operand 0, single buffered']
    #allocation3 [shape = 's32[1]{0}', space=sflag, size = 0x4, scoped, tag = 'scoped memory for tpu_custom_call.1']
    #allocation4 [shape = 's32[1]{0}', space=sflag, size = 0x4, scoped, tag = 'scoped memory for tpu_custom_call.1']
    #allocation5 [shape = 'u8[8192]{0}', space=vmem, size = 0x2000, scoped, tag = 'input window, operand 1, single buffered']
    #allocation6 [shape = 's32[1]{0}', space=sflag, size = 0x4, scoped, tag = 'scoped memory for tpu_custom_call.1']
    #allocation7 [shape = 'u8[16384]{0}', space=vmem, size = 0x4000, scoped, tag = 'output window, operand 0, single buffered']
    %7 = vsyncpa [#allocation3], 0
    %8 = vsyncpa [#allocation6], 0
    %9 = vsyncpa [#allocation4], 0
    // Predicated region
    $region2: #{tpu_custom_call.1} parent=1 // pred_check
      _
    $region3: #{tpu_custom_call.1} parent=1 // pred_check_branch
      %11 = sbr.rel (0) target = $region5
    $region4: #{tpu_custom_call.1} parent=1 // pred_region
      %s13 = ssub.s32 256, 256
      %14 = vsyncadd [#allocation3], %s13
      %s16 = sshll.u32 [#allocation2], 4
      %s17 = int_to_ptr.vmem [resolvable:$true] %s16
      %19 = dma.hbm_to_vmem [thread:$0]  %s0, 256, %s17, [#allocation3]
    $region5: #{tpu_custom_call.1} parent=1 // pred_fallthru
      _
    // Predicated region
    $region6: #{tpu_custom_call.1} parent=1 // pred_check
      _
    $region7: #{tpu_custom_call.1} parent=1 // pred_check_branch
      %21 = sbr.rel (0) target = $region9
    $region8: #{tpu_custom_call.1} parent=1 // pred_region
      %s23 = ssub.s32 256, 256
      %24 = vsyncadd [#allocation6], %s23
      %s26 = sshll.u32 [#allocation5], 4
      %s27 = int_to_ptr.vmem [resolvable:$true] %s26
      %29 = dma.hbm_to_vmem [thread:$0]  %s1, 256, %s27, [#allocation6]
    $region9: #{tpu_custom_call.1} parent=1 // pred_fallthru
      _
    // Predicated region
    $region10: #{tpu_custom_call.1} parent=1 // pred_check
      _
    $region11: #{tpu_custom_call.1} parent=1 // pred_check_branch
      %31 = sbr.rel (0) target = $region13
    $region12: #{tpu_custom_call.1} parent=1 // pred_region
      %32 = dma.done [#allocation3], 256
    $region13: #{tpu_custom_call.1} parent=1 // pred_fallthru
      _
    // Predicated region
    $region14: #{tpu_custom_call.1} parent=1 // pred_check
      _
    $region15: #{tpu_custom_call.1} parent=1 // pred_check_branch
      %34 = sbr.rel (0) target = $region17
    $region16: #{tpu_custom_call.1} parent=1 // pred_region
      %35 = dma.done [#allocation6], 256
    $region17: #{tpu_custom_call.1} parent=1 // pred_fallthru
      _
    %v36 = vld [vmem:[#allocation2] sm:$0xff]
    %v37 = vld [vmem:[#allocation2 + $0x8] sm:$0xff]
    %v40 = vcombine.low %v36, %v37
    %v41 = vcombine.high %v36, %v37
    %v43 = vunpack.c.l.s4 1966171168
    %v44 = vunpack.c.0.s8 %v43
    %v45 = vlaneseq
    %v46 = vshrl.u32 %v45, 7
    %v47 = vsub.s32 %v44, %v46
    %v48 = vrot.slane %v40, %v47
    %v50 = vunpack.c.l.s4 1966171168
    %v51 = vunpack.c.0.s8 %v50
    %v52 = vlaneseq
    %v53 = vshrl.u32 %v52, 7
    %v54 = vsub.s32 %v51, %v53
    %v55 = vrot.slane %v41, %v54
    %v56 = vcombine.high %v48, %v48
    %v57 = vcombine.high %v55, %v55
    %v59 = vunpack.c.l.s4 1966171168
    %v60 = vunpack.c.0.s8 %v59
    %v61 = vlaneseq
    %v62 = vshrl.u32 %v61, 7
    %v63 = vsub.s32 %v60, %v62
    %v64 = vrot.slane %v48, %v63
    %v66 = vunpack.c.l.s4 1966171168
    %v67 = vunpack.c.0.s8 %v66
    %v68 = vlaneseq
    %v69 = vshrl.u32 %v68, 7
    %v70 = vsub.s32 %v67, %v69
    %v71 = vrot.slane %v55, %v70
    %v73 = vunpack.c.l.s4 1966171168
    %v74 = vunpack.c.0.s8 %v73
    %v75 = vlaneseq
    %v76 = vshrl.u32 %v75, 7
    %v77 = vsub.s32 %v74, %v76
    %v78 = vrot.slane %v56, %v77
    %v80 = vunpack.c.l.s4 1966171168
    %v81 = vunpack.c.0.s8 %v80
    %v82 = vlaneseq
    %v83 = vshrl.u32 %v82, 7
    %v84 = vsub.s32 %v81, %v83
    %v85 = vrot.slane %v57, %v84
    %v86 = vcombine.high %v64, %v64
    %v87 = vcombine.high %v71, %v71
    %v88 = vcombine.high %v78, %v78
    %v89 = vcombine.high %v85, %v85
    %v98 = vlaneseq
    %vm99 = vcmp.ge.s32.totalorder %v98, 0
    %vm100 = vcmp.lt.s32.totalorder %v98, 256
    %vm101 = vmand %vm99, %vm100
    %102 = vst.msk [vmem:[#allocation7] ss:$2 sm:$0x3] %vm101, %v64
    %s103 = scalar_lea.vmem [#allocation7], 4
    %104 = vst.msk [vmem:[%s103] ss:$2 sm:$0x3] %vm101, %v78
    %s105 = scalar_lea.vmem [#allocation7], 8
    %106 = vst.msk [vmem:[%s105] ss:$2 sm:$0x3] %vm101, %v86
    %s107 = scalar_lea.vmem [#allocation7], 12
    %108 = vst.msk [vmem:[%s107] ss:$2 sm:$0x3] %vm101, %v88
    %s109 = scalar_lea.vmem [#allocation7], 16
    %110 = vst.msk [vmem:[%s109] ss:$2 sm:$0x3] %vm101, %v71
    %s111 = scalar_lea.vmem [#allocation7], 20
    %112 = vst.msk [vmem:[%s111] ss:$2 sm:$0x3] %vm101, %v85
    %s113 = scalar_lea.vmem [#allocation7], 24
    %114 = vst.msk [vmem:[%s113] ss:$2 sm:$0x3] %vm101, %v87
    %s115 = scalar_lea.vmem [#allocation7], 28
    %116 = vst.msk [vmem:[%s115] ss:$2 sm:$0x3] %vm101, %v89
    %v117 = vld [vmem:[#allocation5] sm:$0xff]
    %v118 = vld [vmem:[#allocation5 + $0x8] sm:$0xff]
    %v121 = vcombine.low %v117, %v118
    %v122 = vcombine.high %v117, %v118
    %v124 = vunpack.c.l.s4 1966171168
    %v125 = vunpack.c.0.s8 %v124
    %v126 = vlaneseq
    %v127 = vshrl.u32 %v126, 7
    %v128 = vsub.s32 %v125, %v127
    %v129 = vrot.slane %v121, %v128
    %v131 = vunpack.c.l.s4 1966171168
    %v132 = vunpack.c.0.s8 %v131
    %v133 = vlaneseq
    %v134 = vshrl.u32 %v133, 7
    %v135 = vsub.s32 %v132, %v134
    %v136 = vrot.slane %v122, %v135
    %v137 = vcombine.high %v129, %v129
    %v138 = vcombine.high %v136, %v136
    %v140 = vunpack.c.l.s4 1966171168
    %v141 = vunpack.c.0.s8 %v140
    %v142 = vlaneseq
    %v143 = vshrl.u32 %v142, 7
    %v144 = vsub.s32 %v141, %v143
    %v145 = vrot.slane %v129, %v144
    %v147 = vunpack.c.l.s4 1966171168
    %v148 = vunpack.c.0.s8 %v147
    %v149 = vlaneseq
    %v150 = vshrl.u32 %v149, 7
    %v151 = vsub.s32 %v148, %v150
    %v152 = vrot.slane %v136, %v151
    %v154 = vunpack.c.l.s4 1966171168
    %v155 = vunpack.c.0.s8 %v154
    %v156 = vlaneseq
    %v157 = vshrl.u32 %v156, 7
    %v158 = vsub.s32 %v155, %v157
    %v159 = vrot.slane %v137, %v158
    %v161 = vunpack.c.l.s4 1966171168
    %v162 = vunpack.c.0.s8 %v161
    %v163 = vlaneseq
    %v164 = vshrl.u32 %v163, 7
    %v165 = vsub.s32 %v162, %v164
    %v166 = vrot.slane %v138, %v165
    %v167 = vcombine.high %v145, %v145
    %v168 = vcombine.high %v152, %v152
    %v169 = vcombine.high %v159, %v159
    %v170 = vcombine.high %v166, %v166
    %s179 = scalar_lea.vmem [#allocation7], 1
    %180 = vst.msk [vmem:[%s179] ss:$2 sm:$0x3] %vm101, %v145
    %s181 = scalar_lea.vmem [#allocation7], 5
    %182 = vst.msk [vmem:[%s181] ss:$2 sm:$0x3] %vm101, %v159
    %s183 = scalar_lea.vmem [#allocation7], 9
    %184 = vst.msk [vmem:[%s183] ss:$2 sm:$0x3] %vm101, %v167
    %s185 = scalar_lea.vmem [#allocation7], 13
    %186 = vst.msk [vmem:[%s185] ss:$2 sm:$0x3] %vm101, %v169
    %s187 = scalar_lea.vmem [#allocation7], 17
    %188 = vst.msk [vmem:[%s187] ss:$2 sm:$0x3] %vm101, %v152
    %s189 = scalar_lea.vmem [#allocation7], 21
    %190 = vst.msk [vmem:[%s189] ss:$2 sm:$0x3] %vm101, %v166
    %s191 = scalar_lea.vmem [#allocation7], 25
    %192 = vst.msk [vmem:[%s191] ss:$2 sm:$0x3] %vm101, %v168
    %s193 = scalar_lea.vmem [#allocation7], 29
    %194 = vst.msk [vmem:[%s193] ss:$2 sm:$0x3] %vm101, %v170
    // Predicated region
    $region18: #{tpu_custom_call.1} parent=1 // pred_check
      _
    $region19: #{tpu_custom_call.1} parent=1 // pred_check_branch
      %196 = sbr.rel (0) target = $region21
    $region20: #{tpu_custom_call.1} parent=1 // pred_region
      %s198 = ssub.s32 512, 512
      %199 = vsyncadd [#allocation4], %s198
      %s200 = sshll.u32 [#allocation7], 4
      %s201 = int_to_ptr.vmem [resolvable:$true] %s200
      %206 = dma.vmem_to_hbm [thread:$0]  %s201, 512, %s2, [#allocation4], 64, 64, 4
    $region21: #{tpu_custom_call.1} parent=1 // pred_fallthru
      _
    // Predicated region
    $region22: #{tpu_custom_call.1} parent=1 // pred_check
      _
    $region23: #{tpu_custom_call.1} parent=1 // pred_check_branch
      %208 = sbr.rel (0) target = $region25
    $region24: #{tpu_custom_call.1} parent=1 // pred_region
      %209 = dma.done [#allocation4], 512
    $region25: #{tpu_custom_call.1} parent=1 // pred_fallthru
      _
    %210 = vsyncpa [#allocation3], 1
    %211 = vsyncpa [#allocation6], 1
    %212 = vsyncpa [#allocation4], 1

</llo_original>
